<compile_context>
chip_gen: v6e
topology: v6e:2x2x1
jax: 0.10.0
libtpu: 0.0.40
codegen_flags: <defaults>
</compile_context>

<pallas_src>
import functools

import jax
import jax.numpy as jnp
from jax.experimental import pallas as pl
from jax.experimental.pallas import tpu as pltpu

_LANE = 128
_SUBLANE = 8
_VMEM_BUDGET = 40 << 20  # conservative: fits v7x's 64 MiB physical VMEM with headroom


def _round_up(x, m):
    return ((x + m - 1) // m) * m


def _apply_activation(h, activation):
    if activation == "relu":
        return jnp.maximum(h, 0.0)
    if activation == "tanh":
        return jnp.tanh(h)
    if activation == "logistic":
        return jax.nn.sigmoid(h)
    raise ValueError(f"unsupported activation: {activation}")


def _fused_mlp_kernel(x_ref, *refs, num_hidden, final_reduce, activation, mxu_dtype):
    """All layers chained in one kernel body; activations stay in vregs/VMEM."""
    o_ref = refs[-1]
    wb = refs[:-1]

    h = x_ref[...]  # (tile_b, input_dim), mxu_dtype (bf16 stream by default)
    for i in range(num_hidden):
        w = wb[2 * i][...]        # (k, n_pad) mxu_dtype
        b = wb[2 * i + 1][...]    # (1, n_pad) f32
        # MXU operands in mxu_dtype, f32 accumulation; bias-add and activation
        # stay f32 (v5e VPU/EUP have no bf16 elementwise support).
        h = jnp.dot(h.astype(mxu_dtype), w, preferred_element_type=jnp.float32) + b
        h = _apply_activation(h, activation)

    w_last = wb[2 * num_hidden][...]
    b_last = wb[2 * num_hidden + 1][...]
    if final_reduce:
        # output_dim == 1: VPU mul + XLU lane reduction instead of a 1-col MXU dot.
        # TODO(synk): if the (tile_b, 1) masked store / narrow writeback DMA shows
        # up in the bundle, switch to a lane-dense out block (batch on lanes).
        y = jnp.sum(h * w_last, axis=-1, keepdims=True) + b_last
    else:
        y = jnp.dot(h.astype(mxu_dtype), w_last, preferred_element_type=jnp.float32) + b_last
    o_ref[...] = y.astype(o_ref.dtype)


def init_mlp_params(key, input_dim, hidden_layer_sizes, output_dim, dtype=jnp.float32):
    """Deterministic parameter init (PyTorch Linear-style uniform bounds)."""
    params = []
    in_features = input_dim
    dims = list(hidden_layer_sizes) + [output_dim]
    for out_features in dims:
        key, kw, kb = jax.random.split(key, 3)
        bound = 1.0 / jnp.sqrt(jnp.asarray(in_features, dtype))
        w = jax.random.uniform(kw, (in_features, out_features), dtype, -bound, bound)
        b = jax.random.uniform(kb, (1, out_features), dtype, -bound, bound)
        params.append((w, b))
        in_features = out_features
    return params


def mlp_regressor_forward(x, params, activation="relu", tile_b=None,
                          use_bf16=True, x_buffer_count=2):
    """Forward pass: [Linear -> act] * len(hidden) -> Linear, one fused kernel."""
    batch, input_dim = x.shape
    num_layers = len(params)
    num_hidden = num_layers - 1
    output_dim = params[-1][0].shape[1]
    final_reduce = output_dim == 1
    out_dtype = x.dtype
    mxu_dtype = jnp.bfloat16 if use_bf16 else x.dtype
    op_bytes = jnp.dtype(mxu_dtype).itemsize
    acc_bytes = 4

    # Stream x at MXU-operand width (halves HBM bytes of the binding stream when
    # bf16). No host-side feature/batch padding -> no extra HBM passes.
    x_op = x.astype(mxu_dtype)

    # ---- pad only weight dims: K to the (padded) incoming width, hidden N to 128 ----
    padded = []
    cur_k = input_dim
    for i, (w, b) in enumerate(params):
        k, n = w.shape
        b2 = b.reshape(1, n).astype(jnp.float32)
        is_last = i == num_layers - 1
        if is_last and final_reduce:
            # Keep the 1-wide final weight as a lane-dense f32 row (used on VPU/XLU).
            w_p = jnp.pad(w.astype(jnp.float32), ((0, cur_k - k), (0, 0))).T  # (1, cur_k)
            b_p = b2                                                          # (1, 1)
        elif is_last:
            w_p = jnp.pad(w, ((0, cur_k - k), (0, 0))).astype(mxu_dtype)      # (cur_k, out)
            b_p = b2
        else:
            n_pad = _round_up(n, _LANE)  # 128-multiples only (mem-bound: don't over-pad)
            w_p = jnp.pad(w, ((0, cur_k - k), (0, n_pad - n))).astype(mxu_dtype)
            b_p = jnp.pad(b2, ((0, 0), (0, n_pad - n)))
            cur_k = n_pad
        padded.append((w_p, b_p))

    out_cols = output_dim

    # ---- tile_b from a VMEM budget that is safe on every generation (incl. v7x) ----
    widest = max([input_dim] + [w.shape[1] for w, _ in padded])
    per_row = (2 * input_dim * op_bytes      # double-buffered x tile
               + widest * acc_bytes          # widest f32 activation (vreg spill)
               + 2 * out_cols * acc_bytes)   # double-buffered out tile
    # Weights/biases are double-buffered inputs even with a constant index_map -> 2x.
    weight_bytes = 2 * sum(int(w.size) * w.dtype.itemsize + int(b.size) * b.dtype.itemsize
                           for w, b in padded)
    if tile_b is None:
        cap = max(16, (_VMEM_BUDGET - weight_bytes) // max(per_row, 1))
        tile_b = int(min(1024, cap))  # TODO(synk): sweep 1024-2048 per generation
    tile_b = max(16, (int(tile_b) // 16) * 16)  # sublane-align (16 covers bf16 packing)
    tile_b = min(tile_b, _round_up(batch, 16))
    assert tile_b % _SUBLANE == 0

    grid = (pl.cdiv(batch, tile_b),)  # Pallas masks the partial edge block

    # ---- specs: batch-tiled x/out, whole-array resident weights/biases ----
    x_spec_kwargs = {}
    if x_buffer_count != 2:
        # TODO(synk): enable (e.g. pl.Buffered(3)) only if the per-step x DMA is
        # still exposed in the bundle after raising tile_b.
        x_spec_kwargs["pipeline_mode"] = pl.Buffered(x_buffer_count)
    in_specs = [pl.BlockSpec((tile_b, input_dim), lambda i: (i, 0), **x_spec_kwargs)]
    flat_wb = []
    for w_p, b_p in padded:
        in_specs.append(pl.BlockSpec(w_p.shape, lambda i: (0, 0)))
        in_specs.append(pl.BlockSpec(b_p.shape, lambda i: (0, 0)))
        flat_wb.extend([w_p, b_p])
    out_specs = pl.BlockSpec((tile_b, out_cols), lambda i: (i, 0))

    # ---- advisory cost estimate ----
    flops = 0
    transcendentals = 0
    cur = input_dim
    for i, (w_p, _) in enumerate(padded):
        if i == num_layers - 1 and final_reduce:
            flops += 2 * batch * cur
        else:
            flops += 2 * batch * w_p.shape[0] * w_p.shape[1]
            cur = w_p.shape[1]
        if i < num_hidden and activation in ("tanh", "logistic"):
            transcendentals += batch * w_p.shape[1]
    bytes_accessed = int(x_op.size * op_bytes
                         + batch * out_cols * jnp.dtype(out_dtype).itemsize
                         + weight_bytes // 2)

    vmem_limit = int(min(weight_bytes + tile_b * per_row + (16 << 20), 60 << 20))

    kernel = functools.partial(
        _fused_mlp_kernel, num_hidden=num_hidden, final_reduce=final_reduce,
        activation=activation, mxu_dtype=mxu_dtype)

    out = pl.pallas_call(
        kernel,
        out_shape=jax.ShapeDtypeStruct((batch, out_cols), out_dtype),
        grid=grid,
        in_specs=in_specs,
        out_specs=out_specs,
        compiler_params=pltpu.CompilerParams(
            dimension_semantics=("parallel",),  # lets v7x's 2 TCs shard the batch grid
            vmem_limit_bytes=vmem_limit,
        ),
        cost_estimate=pl.CostEstimate(
            flops=flops, transcendentals=transcendentals, bytes_accessed=bytes_accessed
        ),
    )(x_op, *flat_wb)

    return out


if __name__ == "__main__":
    # Small shapes consistent with the module's forward: x is (batch, input_dim).
    batch, input_dim, hidden_layer_sizes, output_dim = 8, 16, (32,), 1

    key = jax.random.PRNGKey(0)
    key_x, key_p = jax.random.split(key)
    x = jax.random.normal(key_x, (batch, input_dim), dtype=jnp.float32)
    params = init_mlp_params(key_p, input_dim, hidden_layer_sizes, output_dim)

    out = mlp_regressor_forward(x, params, activation="relu")
    out = jax.block_until_ready(out)
    assert out.shape == (batch, output_dim)

    # Reference 1: pure-JAX mirror of the kernel math (bf16 MXU operands, f32 accum).
    mxu = jnp.bfloat16
    h32 = x.astype(mxu).astype(jnp.float32)
    h_op = x.astype(mxu)
    for (w, b) in params[:-1]:
        h32 = jnp.dot(h_op, w.astype(mxu), preferred_element_type=jnp.float32) + b.reshape(1, -1)
        h32 = jnp.maximum(h32, 0.0)
        h_op = h32.astype(mxu)
    w_l, b_l = params[-1]
    ref_bf16 = jnp.sum(h32 * w_l.reshape(1, -1), axis=-1, keepdims=True) + b_l.reshape(1, 1)
    assert jnp.allclose(out, ref_bf16, atol=1e-4, rtol=1e-3)

    # Reference 2: full-f32 forward (module semantics), loose tol for bf16 operands.
    ref = x
    for i, (w, b) in enumerate(params):
        ref = ref @ w + b.reshape(1, -1)
        if i < len(params) - 1:
            ref = jnp.maximum(ref, 0.0)
    assert jnp.allclose(out, ref, atol=3e-2, rtol=3e-2)

    print("KERNEL_OK")
</pallas_src>

<mosaic_0001>
module attributes {stable_mosaic.version = 11 : i64} {
  func.func @_fused_mlp_kernel(%arg0: i32, %arg1: memref<16x16xbf16, #tpu.memory_space<vmem>>, %arg2: memref<16x128xbf16, #tpu.memory_space<vmem>>, %arg3: memref<1x128xf32, #tpu.memory_space<vmem>>, %arg4: memref<1x128xf32, #tpu.memory_space<vmem>>, %arg5: memref<1x1xf32, #tpu.memory_space<vmem>>, %arg6: memref<16x1xf32, #tpu.memory_space<vmem>>) attributes {dimension_semantics = [#tpu.dimension_semantics<parallel>], iteration_bounds = array<i64: 1>, scalar_prefetch = 0 : i64, scratch_operands = 0 : i64, tpu.core_type = #tpu.core_type<tc>, window_params = [{transform_indices = @transform_0, window_bounds = array<i64: 16, 16>}, {pipeline_mode = #tpu.pipeline_mode<synchronous>, transform_indices = @transform_1, window_bounds = array<i64: 16, 128>}, {pipeline_mode = #tpu.pipeline_mode<synchronous>, transform_indices = @transform_2, window_bounds = array<i64: 1, 128>}, {pipeline_mode = #tpu.pipeline_mode<synchronous>, transform_indices = @transform_3, window_bounds = array<i64: 1, 128>}, {pipeline_mode = #tpu.pipeline_mode<synchronous>, transform_indices = @transform_4, window_bounds = array<i64: 1, 1>}, {transform_indices = @transform_5, window_bounds = array<i64: 16, 1>}]} {
    %c0 = arith.constant 0 : index
    %c0_0 = arith.constant 0 : index
    %0 = vector.load %arg1[%c0, %c0_0] : memref<16x16xbf16, #tpu.memory_space<vmem>>, vector<16x16xbf16>
    %c0_1 = arith.constant 0 : index
    %c0_2 = arith.constant 0 : index
    %1 = vector.load %arg2[%c0_1, %c0_2] : memref<16x128xbf16, #tpu.memory_space<vmem>>, vector<16x128xbf16>
    %c0_3 = arith.constant 0 : index
    %c0_4 = arith.constant 0 : index
    %2 = vector.load %arg3[%c0_3, %c0_4] : memref<1x128xf32, #tpu.memory_space<vmem>>, vector<1x128xf32>
    %cst = arith.constant dense<0.000000e+00> : vector<16x128xf32>
    %3 = tpu.matmul %0, %1, %cst {dimension_numbers = #tpu.dot_dimension_numbers<[1], [0], [0], [1], [0, 0, 1, 1], [], []>} : vector<16x16xbf16>, vector<16x128xbf16>, vector<16x128xf32> -> vector<16x128xf32>
    %4 = vector.broadcast %2 : vector<1x128xf32> to vector<16x128xf32>
    %5 = arith.addf %3, %4 : vector<16x128xf32>
    %cst_5 = arith.constant 0.000000e+00 : f32
    %6 = vector.broadcast %cst_5 : f32 to vector<16x128xf32>
    %7 = arith.maximumf %5, %6 : vector<16x128xf32>
    %c0_6 = arith.constant 0 : index
    %c0_7 = arith.constant 0 : index
    %8 = vector.load %arg4[%c0_6, %c0_7] : memref<1x128xf32, #tpu.memory_space<vmem>>, vector<1x128xf32>
    %c0_8 = arith.constant 0 : index
    %c0_9 = arith.constant 0 : index
    %9 = vector.load %arg5[%c0_8, %c0_9] : memref<1x1xf32, #tpu.memory_space<vmem>>, vector<1x1xf32>
    %10 = vector.broadcast %8 : vector<1x128xf32> to vector<16x128xf32>
    %11 = arith.mulf %7, %10 : vector<16x128xf32>
    %cst_10 = arith.constant dense<0.000000e+00> : vector<16xf32>
    %12 = vector.multi_reduction <add>, %11, %cst_10 [1] : vector<16x128xf32> to vector<16xf32>
    %13 = vector.shape_cast %12 : vector<16xf32> to vector<16x1xf32>
    %14 = vector.broadcast %9 : vector<1x1xf32> to vector<16x1xf32>
    %15 = arith.addf %13, %14 : vector<16x1xf32>
    %c0_11 = arith.constant 0 : index
    %c0_12 = arith.constant 0 : index
    %16 = vector.load %arg6[%c0_11, %c0_12] : memref<16x1xf32, #tpu.memory_space<vmem>>, vector<16x1xf32>
    tpu.vector_store %arg6[%c0_11, %c0_12], %15 {strides = array<i32>} : memref<16x1xf32, #tpu.memory_space<vmem>>, vector<16x1xf32>,
    return
  }
  func.func @transform_0(%arg0: i32) -> (i32, i32) {
    %c0_i32 = arith.constant 0 : i32
    %c0_i32_0 = arith.constant 0 : i32
    return %arg0, %c0_i32 : i32, i32
  }
  func.func @transform_1(%arg0: i32) -> (i32, i32) {
    %c0_i32 = arith.constant 0 : i32
    %c0_i32_0 = arith.constant 0 : i32
    %c0_i32_1 = arith.constant 0 : i32
    return %c0_i32, %c0_i32_0 : i32, i32
  }
  func.func @transform_2(%arg0: i32) -> (i32, i32) {
    %c0_i32 = arith.constant 0 : i32
    %c0_i32_0 = arith.constant 0 : i32
    %c0_i32_1 = arith.constant 0 : i32
    return %c0_i32, %c0_i32_0 : i32, i32
  }
  func.func @transform_3(%arg0: i32) -> (i32, i32) {
    %c0_i32 = arith.constant 0 : i32
    %c0_i32_0 = arith.constant 0 : i32
    %c0_i32_1 = arith.constant 0 : i32
    return %c0_i32, %c0_i32_0 : i32, i32
  }
  func.func @transform_4(%arg0: i32) -> (i32, i32) {
    %c0_i32 = arith.constant 0 : i32
    %c0_i32_0 = arith.constant 0 : i32
    %c0_i32_1 = arith.constant 0 : i32
    return %c0_i32, %c0_i32_0 : i32, i32
  }
  func.func @transform_5(%arg0: i32) -> (i32, i32) {
    %c0_i32 = arith.constant 0 : i32
    %c0_i32_0 = arith.constant 0 : i32
    return %arg0, %c0_i32 : i32, i32
  }
}

</mosaic_0001>

<llo_original>
// kernel: tpu_custom_call.1
$region0: #{tpu_custom_call.1}
  #allocation0 [shape = 'u32[]', space=smem, size = 0x4, offset = 0x4, fixed_abs, tag = 'smem constant byte address 0x4 - core index']
  #allocation1 [shape = 'u32[144,128]{1,0:T(1,128)}', space=vmem, size = 0x12000, scoped, tag = 'internal scratch']
  #allocation2 [shape = 'f32[1,1]{1,0:T(1,128)S(1)}', space=vmem, size = 0x200, scoped, tag = 'scoped memory for tpu_custom_call.1']
  %s0 = inlined_call_operand.hbm [shape: bf16[8,16], index: 0, kind: input, shape index: {}]
  %s1 = inlined_call_operand.hbm [shape: bf16[16,128], index: 1, kind: input, shape index: {}]
  %s2 = inlined_call_operand.vmem [shape: f32[1,128], index: 2, kind: input, shape index: {}]
  %s3 = inlined_call_operand.vmem [shape: f32[1,128], index: 3, kind: input, shape index: {}]
  %s4 = inlined_call_operand.<no memory space> [shape: f32[1,1], index: 4, kind: input, shape index: {}]
  %s5 = inlined_call_operand.vmem [shape: f32[8,1], index: 5, kind: output, shape index: {}]
  %s6 = sld [smem:[#allocation0]]
  $region72: #{tpu_custom_call.1} parent=0
    _
  %s8 = ssub.s32 1, %s6
  %s9 = scalar_select 0, %s8, %s6
  %v10 = vstv %s4
  %11 = vst [vmem:[#allocation2] sm:$0x1] %v10
  $region1: #{tpu_custom_call.1} parent=0
    #allocation3 [shape = 'u8[4096]{0}', space=vmem, size = 0x1000, scoped, tag = 'input window, operand 0, single buffered']
    #allocation4 [shape = 's32[1]{0}', space=sflag, size = 0x4, scoped, tag = 'scoped memory for tpu_custom_call.1']
    #allocation5 [shape = 'u8[4096]{0}', space=vmem, size = 0x1000, scoped, tag = 'input window, operand 1, single buffered']
    #allocation6 [shape = 's32[1]{0}', space=sflag, size = 0x4, scoped, tag = 'scoped memory for tpu_custom_call.1']
    #allocation7 [shape = 'u8[8192]{0}', space=vmem, size = 0x2000, scoped, tag = 'output window, operand 0, single buffered']
    %12 = vsyncpa [#allocation4], 0
    %13 = vsyncpa [#allocation6], 0
    // Predicated region
    $region2: #{tpu_custom_call.1} parent=1 // pred_check
      _
    $region3: #{tpu_custom_call.1} parent=1 // pred_check_branch
      %15 = sbr.rel (0) target = $region5
    $region4: #{tpu_custom_call.1} parent=1 // pred_region
      %s17 = ssub.s32 128, 64
      %18 = vsyncadd [#allocation4], %s17
      %s19 = sshll.u32 [#allocation3], 4
      %s20 = int_to_ptr.vmem [resolvable:$true] %s19
      %25 = dma.hbm_to_vmem [thread:$0]  %s0, 64, %s20, [#allocation4], 64, 64, 4
    $region5: #{tpu_custom_call.1} parent=1 // pred_fallthru
      _
    // Predicated region
    $region6: #{tpu_custom_call.1} parent=1 // pred_check
      _
    $region7: #{tpu_custom_call.1} parent=1 // pred_check_branch
      %27 = sbr.rel (0) target = $region9
    $region8: #{tpu_custom_call.1} parent=1 // pred_region
      %s29 = ssub.s32 128, 128
      %30 = vsyncadd [#allocation6], %s29
      %s31 = sshll.u32 [#allocation5], 4
      %s32 = int_to_ptr.vmem [resolvable:$true] %s31
      %37 = dma.hbm_to_vmem [thread:$0]  %s1, 128, %s32, [#allocation6], 64, 64, 4
    $region9: #{tpu_custom_call.1} parent=1 // pred_fallthru
      _
    // Predicated region
    $region10: #{tpu_custom_call.1} parent=1 // pred_check
      _
    $region11: #{tpu_custom_call.1} parent=1 // pred_check_branch
      %39 = sbr.rel (0) target = $region13
    $region12: #{tpu_custom_call.1} parent=1 // pred_region
      _
    $region13: #{tpu_custom_call.1} parent=1 // pred_fallthru
      _
    // Predicated region
    $region14: #{tpu_custom_call.1} parent=1 // pred_check
      _
    $region15: #{tpu_custom_call.1} parent=1 // pred_check_branch
      %41 = sbr.rel (0) target = $region17
    $region16: #{tpu_custom_call.1} parent=1 // pred_region
      _
    $region17: #{tpu_custom_call.1} parent=1 // pred_fallthru
      _
    // Predicated region
    $region18: #{tpu_custom_call.1} parent=1 // pred_check
      _
    $region19: #{tpu_custom_call.1} parent=1 // pred_check_branch
      %43 = sbr.rel (0) target = $region21
    $region20: #{tpu_custom_call.1} parent=1 // pred_region
      _
    $region21: #{tpu_custom_call.1} parent=1 // pred_fallthru
      _
    // Predicated region
    $region22: #{tpu_custom_call.1} parent=1 // pred_check
      _
    $region23: #{tpu_custom_call.1} parent=1 // pred_check_branch
      %45 = sbr.rel (0) target = $region25
    $region24: #{tpu_custom_call.1} parent=1 // pred_region
      %46 = dma.done [#allocation4], 128
    $region25: #{tpu_custom_call.1} parent=1 // pred_fallthru
      _
    // Predicated region
    $region26: #{tpu_custom_call.1} parent=1 // pred_check
      _
    $region27: #{tpu_custom_call.1} parent=1 // pred_check_branch
      %48 = sbr.rel (0) target = $region29
    $region28: #{tpu_custom_call.1} parent=1 // pred_region
      %49 = dma.done [#allocation6], 128
    $region29: #{tpu_custom_call.1} parent=1 // pred_fallthru
      _
    %v51 = vld [vmem:[#allocation3] sm:$0xf]
    %v52 = vld [vmem:[#allocation3 + $0x4] sm:$0xf]
    %v53 = vld [vmem:[#allocation5] sm:$0xf]
    %v54 = vld [vmem:[#allocation5 + $0x4] sm:$0xf]
    %v55 = vld [vmem:[%s2] sm:$0x1]
    %v57 = vlaneseq
    %v58 = vshrl.u32 %v57, 7
    %v59 = vsub.s32 0, %v58
    %v60 = vrot.slane %v55, %v59
    %v64 = vunpack.c.l.b16 %v51
    %v65 = vunpack.c.l.b16 %v52
    %v66 = vpack.c.b16 %v65, %v64
    %v69 = vunpack.c.l.b16 %v53
    %v70 = vunpack.c.l.b16 %v54
    %v71 = vpack.c.b16 %v70, %v69
    %vm73 = vcmask 130048
    %v75 = vsel %vm73, %v66, 0
    %77 = vmatprep.subr.bf16.mxu0 0
    %78 = vmatpush1.bf16.msra.mxu0 0
    %79 = vmatprep.subr.bf16.mxu0 0
    %80 = vmatpush1.bf16.msra.mxu0 0
    %81 = vmatprep.subr.bf16.mxu0 0
    %82 = vmatpush1.bf16.msra.mxu0 0
    %83 = vmatprep.subr.bf16.mxu0 0
    %84 = vmatpush1.bf16.msra.mxu0 0
    %85 = vmatprep.subr.bf16.mxu0 0
    %86 = vmatpush1.bf16.msra.mxu0 0
    %87 = vmatprep.subr.bf16.mxu0 0
    %88 = vmatpush1.bf16.msra.mxu0 0
    %89 = vmatprep.subr.bf16.mxu0 0
    %90 = vmatpush1.bf16.msra.mxu0 0
    %91 = vmatprep.subr.bf16.mxu0 0
    %92 = vmatpush1.bf16.msra.mxu0 %v71
    %93 = vmatprep.subr.bf16.mxu0 0
    %94 = vmatpush2.bf16.msra.mxu0 0
    %95 = vmatprep.subr.bf16.mxu0 0
    %96 = vmatpush2.bf16.msra.mxu0 0
    %97 = vmatprep.subr.bf16.mxu0 0
    %98 = vmatpush2.bf16.msra.mxu0 0
    %99 = vmatprep.subr.bf16.mxu0 0
    %100 = vmatpush2.bf16.msra.mxu0 0
    %101 = vmatprep.subr.bf16.mxu0 0
    %102 = vmatpush2.bf16.msra.mxu0 0
    %103 = vmatprep.subr.bf16.mxu0 0
    %104 = vmatpush2.bf16.msra.mxu0 0
    %105 = vmatprep.subr.bf16.mxu0 0
    %106 = vmatpush2.bf16.msra.mxu0 0
    %107 = vmatprep.subr.bf16.mxu0 0
    %108 = vmatpush2.bf16.msra.mxu0 0
    %109 = vmatprep.mubr.bf16.mxu0 0
    %110 = vmatmul.mubr.bf16.gmra.mxu0 %v75
    %v111 = vpop.f32.mrf.mxu0
    %v112 = vadd.f32 %v60, %v111
    %v113 = vpop.f32.mrf.mxu0
    %v114 = vpop.f32.mrf.mxu0
    %v115 = vadd.f32 %v60, %v114
    %v116 = vpop.f32.mrf.mxu0
    %117 = vdwg.mxu0
    %v118 = vmax.f32 %v112, 0.0
    %v119 = vmax.f32 %v115, 0.0
    %v120 = vld [vmem:[%s3] sm:$0x1]
    %v121 = vld [vmem:[#allocation2] sm:$0x1]
    %v123 = vlaneseq
    %v124 = vshrl.u32 %v123, 7
    %v125 = vsub.s32 0, %v124
    %v126 = vrot.slane %v120, %v125
    %v128 = vmul.f32 %v118, %v126
    %v129 = vmul.f32 %v119, %v126
    %130 = vadd.xlane.f32.xlu0 %v128
    %v131 = vpop.xlane.xlu0 %130
    %132 = vadd.xlane.f32.xlu0 %v129
    %v133 = vpop.xlane.xlu0 %132
    %v135 = vlaneseq
    %v136 = vshrl.u32 %v135, 7
    %v137 = vsub.s32 0, %v136
    %v138 = vrot.slane %v121, %v137
    %v140 = vadd.f32 %v131, %v138
    %v141 = vadd.f32 %v133, %v138
    %vm142 = vcmask 7168
    %143 = vst.msk [vmem:[#allocation7] sm:$0xff] %vm142, %v140
    %144 = vst.msk [vmem:[#allocation7 + $0x8] sm:$0xff] %vm142, %v141
    // Predicated region
    $region30: #{tpu_custom_call.1} parent=1 // pred_check
      _
    $region31: #{tpu_custom_call.1} parent=1 // pred_check_branch
      %146 = sbr.rel (0) target = $region33
    $region32: #{tpu_custom_call.1} parent=1 // pred_region
      // Predicated region
      $region34: #{tpu_custom_call.1} parent=32 // pred_check
        _
      $region35: #{tpu_custom_call.1} parent=32 // pred_check_branch
        %148 = sbr.rel (0) target = $region37
      $region36: #{tpu_custom_call.1} parent=32 // pred_region
        // Predicated region
        $region38: #{tpu_custom_call.1} parent=36 // pred_check
          _
        $region39: #{tpu_custom_call.1} parent=36 // pred_check_branch
          %150 = sbr.rel (0) target = $region41
        $region40: #{tpu_custom_call.1} parent=36 // pred_region
          // Predicated region
          $region53: #{tpu_custom_call.1} parent=40 // pred_check
            _
          $region54: #{tpu_custom_call.1} parent=40 // pred_check_branch
            %166 = sbr.rel (0) target = $region56
          $region55: #{tpu_custom_call.1} parent=40 // pred_region
            loop: start=0, step=1, limit=1
            $region57: #{tpu_custom_call.1} parent=55 // loop_pre_header
              _
            $region58: #{tpu_custom_call.1} parent=55 // loop_header
              %s168 = sphi 0, %s172
              %p169 = scmp.ge.s32.totalorder %s168, 1
              %s173 = sphi [#allocation7], [#allocation7]
              %s174 = sphi %s5, %s5
            $region59: #{tpu_custom_call.1} parent=55 // loop_header_branch
              %171 = sbr.rel (%p169) target = $region63
            $region60: #{tpu_custom_call.1} parent=55 // loop_body
              %v175 = vld [vmem:[%s173] sm:$0xff]
              %176 = vst [vmem:[%s174] sm:$0xff] %v175
            $region61: #{tpu_custom_call.1} parent=55 // loop_footer
              %s172 = sadd.s32 1, %s168
            $region62: #{tpu_custom_call.1} parent=55 // loop_footer_branch
              %167 = sbr.rel target = $region58
            $region63: #{tpu_custom_call.1} parent=55 // loop_exit
              _
          $region56: #{tpu_custom_call.1} parent=40 // pred_fallthru
            _
          // Predicated region
          $region64: #{tpu_custom_call.1} parent=40 // pred_check
            _
          $region65: #{tpu_custom_call.1} parent=40 // pred_check_branch
            %178 = sbr.rel target = $region67
          $region66: #{tpu_custom_call.1} parent=40 // pred_region
            _
          $region67: #{tpu_custom_call.1} parent=40 // pred_fallthru
            _
        $region41: #{tpu_custom_call.1} parent=36 // pred_fallthru
          _
        // Predicated region
        $region42: #{tpu_custom_call.1} parent=36 // pred_check
          _
        $region43: #{tpu_custom_call.1} parent=36 // pred_check_branch
          %152 = sbr.rel target = $region45
        $region44: #{tpu_custom_call.1} parent=36 // pred_region
          %s154 = ssub.s32 256, 1
          loop: start=0, step=1, limit=1
          $region46: #{tpu_custom_call.1} parent=44 // loop_pre_header
            _
          $region47: #{tpu_custom_call.1} parent=44 // loop_header
            %s156 = sphi 0, %s160
            %p157 = scmp.ge.s32.totalorder %s156, 1
            %s161 = sphi [#allocation7], [#allocation7]
            %s162 = sphi %s5, %s5
          $region48: #{tpu_custom_call.1} parent=44 // loop_header_branch
            %159 = sbr.rel (%p157) target = $region52
          $region49: #{tpu_custom_call.1} parent=44 // loop_body
            %v163 = vld [vmem:[%s161] sm:%s154]
            %164 = vst [vmem:[%s162] sm:%s154] %v163
          $region50: #{tpu_custom_call.1} parent=44 // loop_footer
            %s160 = sadd.s32 1, %s156
          $region51: #{tpu_custom_call.1} parent=44 // loop_footer_branch
            %155 = sbr.rel target = $region47
          $region52: #{tpu_custom_call.1} parent=44 // loop_exit
            _
        $region45: #{tpu_custom_call.1} parent=36 // pred_fallthru
          _
      $region37: #{tpu_custom_call.1} parent=32 // pred_fallthru
        _
      %179 = vnop
    $region33: #{tpu_custom_call.1} parent=1 // pred_fallthru
      _
    // Predicated region
    $region68: #{tpu_custom_call.1} parent=1 // pred_check
      _
    $region69: #{tpu_custom_call.1} parent=1 // pred_check_branch
      %181 = sbr.rel (0) target = $region71
    $region70: #{tpu_custom_call.1} parent=1 // pred_region
      _
    $region71: #{tpu_custom_call.1} parent=1 // pred_fallthru
      _
    %182 = vsyncpa [#allocation4], 1
    %183 = vsyncpa [#allocation6], 1

</llo_original>
